<compile_context>
chip_gen: v7x
topology: tpu7x:2x2x1
jax: 0.10.0
libtpu: 0.0.40
codegen_flags: <defaults>
</compile_context>

<pallas_src>
import functools
import random

import jax
import jax.numpy as jnp
from jax.experimental import pallas as pl
from jax.experimental.pallas import tpu as pltpu

_MIB = 1024 * 1024


def _scale_mul_kernel(x_ref, scale_ref, o_ref):
    # Elementwise out = x * scale; scale broadcasts along lanes ((rb,1) case) or
    # along sublanes ((1,lb) case). Native dtype (bf16 VPU on v6e/v7x; f32 elsewhere).
    o_ref[...] = x_ref[...] * scale_ref[...]


@functools.lru_cache(maxsize=1)
def _target_tile_bytes():
    """Per-buffer tile budget, generation-aware."""
    try:
        kind = jax.devices()[0].device_kind.lower()
    except Exception:  # pragma: no cover - backend not initialized / non-TPU
        return 2 * _MIB
    if "v5" in kind:
        # v5e: 16 MiB scoped-VMEM default; 2 MiB tiles (~8 MiB live) are ~85% of roofline.
        return 2 * _MIB
    # v6e / v7x: bigger tiles amortize per-step overhead; vmem_limit raised explicitly.
    return 4 * _MIB


def _row_lane_blocks(total_rows, lanes, itemsize, target_bytes):
    """Pick a (row_block, lane_block) tile ~target_bytes, (sublane,128)-legal."""
    sub = 8 * max(1, 4 // itemsize)  # sublane packing: 8 f32, 16 bf16, 32 int8
    # Lane (last-dim) block: full extent, or a 128-multiple chunk if one sublane
    # group of full-width rows alone would blow the tile budget.
    lane_cap = max(128, (target_bytes // (sub * itemsize)) // 128 * 128)
    if lanes % 128 == 0 and lanes > lane_cap:
        lane_block = lane_cap
    else:
        lane_block = lanes
    # Row (second-to-last dim) block: multiple of `sub`, or full extent if small.
    rows_fit = max(1, target_bytes // (lane_block * itemsize))
    if rows_fit >= total_rows:
        row_block = total_rows  # full extent is always legal
    else:
        row_block = max(sub, (rows_fit // sub) * sub)

    # Megacore (v7x has 2 TCs): if everything landed in a single (1,1) grid step
    # but the array is big enough to be worth sharding, split so both cores
    # (and their DMA queues) get work.
    total_bytes = total_rows * lanes * itemsize
    if row_block == total_rows and lane_block == lanes and total_bytes >= 512 * 1024:
        if total_rows >= 2 * sub:
            half = (total_rows + 1) // 2
            row_block = max(sub, ((half + sub - 1) // sub) * sub)
        elif lanes % 128 == 0 and lanes >= 256:
            half = (lanes // 2 + 127) // 128 * 128
            lane_block = max(128, half)
    return row_block, lane_block


def _apply_channel_scale_2d(x2d, scale2d, target_tile_bytes):
    """out[r, l] = x2d[r, l] * scale2d[r or 0, l or 0] via a lane-dense Pallas kernel."""
    rows, lanes = x2d.shape
    sr, _ = scale2d.shape
    itemsize = x2d.dtype.itemsize
    row_block, lane_block = _row_lane_blocks(rows, lanes, itemsize, target_tile_bytes)
    grid = (pl.cdiv(rows, row_block), pl.cdiv(lanes, lane_block))

    x_spec = pl.BlockSpec((row_block, lane_block), lambda i, j: (i, j))
    if sr == 1:
        scale_spec = pl.BlockSpec((1, lane_block), lambda i, j: (0, j))
    else:
        scale_spec = pl.BlockSpec((row_block, 1), lambda i, j: (i, 0))

    return pl.pallas_call(
        _scale_mul_kernel,
        out_shape=jax.ShapeDtypeStruct(x2d.shape, x2d.dtype),
        grid=grid,
        in_specs=[x_spec, scale_spec],
        out_specs=x_spec,
        compiler_params=pltpu.CompilerParams(
            dimension_semantics=("parallel", "parallel"),
            vmem_limit_bytes=32 * _MIB),
        cost_estimate=pl.CostEstimate(
            flops=int(x2d.size),
            transcendentals=0,
            bytes_accessed=int(2 * x2d.size * itemsize
                               + scale2d.size * scale2d.dtype.itemsize)),
    )(x2d, scale2d)


@functools.partial(jax.jit, static_argnames=("drop_prob",))
def _drop_channels(x, key, *, drop_prob):
    """Fused (jitted) mask construction + Pallas elementwise scale. drop_prob is static."""
    keep_prob = 1.0 - drop_prob
    C = x.shape[1]
    if x.ndim == 4:
        rand = jax.random.uniform(key, (1, C, 1, 1), dtype=jnp.float32)
    else:
        rand = jax.random.uniform(key, (1, C), dtype=jnp.float32)

    # Per-channel scale folded once: keep -> 1/keep_prob, drop -> 0. Cast to the
    # input dtype so the kernel is a single native multiply (no per-vreg converts).
    scale_c = jnp.where(rand.reshape(C) < keep_prob,
                        jnp.float32(1.0 / keep_prob),
                        jnp.float32(0.0)).astype(x.dtype)

    tile_bytes = _target_tile_bytes()
    if x.ndim == 2:
        return _apply_channel_scale_2d(x, scale_c.reshape(1, C), tile_bytes)

    N, _, H, W = x.shape
    hw = H * W
    if hw % 128 == 0:
        # Already lane-dense per row: (N*C, H*W) with a per-row scale.
        x2d = x.reshape(N * C, hw)
        scale2d = jnp.broadcast_to(scale_c[None, :], (N, C)).reshape(N * C, 1)
    else:
        # H*W not a lane multiple (e.g. 7x7, 14x14): fold C into the lane dim so
        # stores stay lane-dense; per-lane scale of length C*H*W (channel-major).
        x2d = x.reshape(N, C * hw)
        scale2d = jnp.repeat(scale_c, hw).reshape(1, C * hw)
    out2d = _apply_channel_scale_2d(x2d, scale2d, tile_bytes)
    return out2d.reshape(x.shape)


def batch_drop_channel(x, key, drop_prob: float = 0.1, p: float = 0.5,
                       training: bool = True, skip=None):
    """JAX/Pallas equivalent of BatchDropChannel.forward (2-D or 4-D NCHW input).

    `skip` overrides the module-level coin flip; if None, a Python-RNG decision
    `random.uniform(0,1) < p` is used (exactly like the PyTorch module -- a host-side
    control-flow decision, never a device sync).
    """
    if drop_prob < 0 or drop_prob > 1:
        raise ValueError(f"drop_prob has to be between 0 and 1, but got {drop_prob}")
    if p < 0 or p > 1:
        raise ValueError(f"p has to be between 0 and 1, but got {p}")
    if not training:
        return x
    if x.ndim not in (2, 4):
        raise ValueError(f"Unsupported ndim, only support 2 or 4, got {x.ndim}")

    if skip is None:
        # TODO(synk): host Python RNG (like torch's random.uniform); pass `skip=`
        # explicitly for a fully traceable / reproducible call.
        skip = random.uniform(0, 1) < p
    if skip:
        return x

    keep_prob = 1.0 - drop_prob
    if keep_prob == 0.0:
        # Every channel dropped. (The PyTorch module would emit NaN via 0/0.)
        return jnp.zeros_like(x)

    return _drop_channels(x, key, drop_prob=float(drop_prob))


if __name__ == "__main__":
    random.seed(0)
    key = jax.random.PRNGKey(0)
    k_x, k_mask = jax.random.split(key)
    drop_prob = 0.1
    keep_prob = 1.0 - drop_prob

    # --- 4-D NCHW path, H*W multiple of 128 -> (N*C, H*W) per-row-scale kernel ---
    N, C, H, W = 2, 4, 16, 16
    x = jax.random.normal(k_x, (N, C, H, W), dtype=jnp.float32)
    out = jax.block_until_ready(
        batch_drop_channel(x, k_mask, drop_prob=drop_prob, p=0.0,
                           training=True, skip=False))
    rand = jax.random.uniform(k_mask, (1, C, 1, 1), dtype=jnp.float32)
    mask = (rand < keep_prob).astype(jnp.float32)
    ref = (x * mask / keep_prob).astype(x.dtype)
    assert out.shape == x.shape and out.dtype == x.dtype
    assert jnp.allclose(out, ref, atol=1e-6, rtol=1e-5)

    # --- 4-D NCHW path, H*W NOT a multiple of 128 -> (N, C*H*W) per-lane-scale kernel ---
    x7 = jax.random.normal(jax.random.PRNGKey(2), (2, 4, 7, 7), dtype=jnp.float32)
    out7 = jax.block_until_ready(
        batch_drop_channel(x7, k_mask, drop_prob=drop_prob, p=0.0,
                           training=True, skip=False))
    rand7 = jax.random.uniform(k_mask, (1, 4, 1, 1), dtype=jnp.float32)
    ref7 = (x7 * (rand7 < keep_prob).astype(jnp.float32) / keep_prob).astype(x7.dtype)
    assert jnp.allclose(out7, ref7, atol=1e-6, rtol=1e-5)

    # --- 2-D (N, C) path ---
    N2, C2 = 16, 128
    x2 = jax.random.normal(jax.random.PRNGKey(1), (N2, C2), dtype=jnp.float32)
    out2 = jax.block_until_ready(
        batch_drop_channel(x2, k_mask, drop_prob=drop_prob, p=0.0,
                           training=True, skip=False))
    rand2 = jax.random.uniform(k_mask, (1, C2), dtype=jnp.float32)
    mask2 = (rand2 < keep_prob).astype(jnp.float32)
    ref2 = (x2 * mask2 / keep_prob).astype(x2.dtype)
    assert jnp.allclose(out2, ref2, atol=1e-6, rtol=1e-5)

    # Eval mode is identity; module-level skip is identity; drop_prob=1.0 zeroes all.
    assert jnp.array_equal(batch_drop_channel(x, k_mask, training=False), x)
    assert jnp.array_equal(
        batch_drop_channel(x, k_mask, p=1.0, training=True, skip=True), x)
    out_all = batch_drop_channel(x, k_mask, drop_prob=1.0, p=0.0,
                                 training=True, skip=False)
    assert jnp.array_equal(out_all, jnp.zeros_like(x))

    print("KERNEL_OK")
</pallas_src>

<mosaic_0001>
module attributes {stable_mosaic.version = 11 : i64} {
  func.func @_scale_mul_kernel(%arg0: i32, %arg1: i32, %arg2: memref<8x256xf32, #tpu.memory_space<vmem>>, %arg3: memref<8x1xf32, #tpu.memory_space<vmem>>, %arg4: memref<8x256xf32, #tpu.memory_space<vmem>>) attributes {dimension_semantics = [#tpu.dimension_semantics<parallel>, #tpu.dimension_semantics<parallel>], iteration_bounds = array<i64: 1, 1>, scalar_prefetch = 0 : i64, scratch_operands = 0 : i64, tpu.core_type = #tpu.core_type<tc>, window_params = [{transform_indices = @transform_0, window_bounds = array<i64: 8, 256>}, {transform_indices = @transform_1, window_bounds = array<i64: 8, 1>}, {transform_indices = @transform_2, window_bounds = array<i64: 8, 256>}]} {
    %c0 = arith.constant 0 : index
    %c0_0 = arith.constant 0 : index
    %0 = vector.load %arg2[%c0, %c0_0] : memref<8x256xf32, #tpu.memory_space<vmem>>, vector<8x256xf32>
    %c0_1 = arith.constant 0 : index
    %c0_2 = arith.constant 0 : index
    %1 = vector.load %arg3[%c0_1, %c0_2] : memref<8x1xf32, #tpu.memory_space<vmem>>, vector<8x1xf32>
    %2 = vector.broadcast %1 : vector<8x1xf32> to vector<8x256xf32>
    %3 = arith.mulf %0, %2 : vector<8x256xf32>
    %c0_3 = arith.constant 0 : index
    %c0_4 = arith.constant 0 : index
    %4 = vector.load %arg4[%c0_3, %c0_4] : memref<8x256xf32, #tpu.memory_space<vmem>>, vector<8x256xf32>
    tpu.vector_store %arg4[%c0_3, %c0_4], %3 {strides = array<i32>} : memref<8x256xf32, #tpu.memory_space<vmem>>, vector<8x256xf32>,
    return
  }
  func.func @transform_0(%arg0: i32, %arg1: i32) -> (i32, i32) {
    %c0_i32 = arith.constant 0 : i32
    return %arg0, %arg1 : i32, i32
  }
  func.func @transform_1(%arg0: i32, %arg1: i32) -> (i32, i32) {
    %c0_i32 = arith.constant 0 : i32
    %c0_i32_0 = arith.constant 0 : i32
    return %arg0, %c0_i32 : i32, i32
  }
  func.func @transform_2(%arg0: i32, %arg1: i32) -> (i32, i32) {
    %c0_i32 = arith.constant 0 : i32
    return %arg0, %arg1 : i32, i32
  }
}

</mosaic_0001>

<llo_original>
// kernel: _drop_channels.1
$region0: #{_drop_channels.1}
  #allocation0 [shape = 'u32[]', space=smem, size = 0x4, offset = 0x4, fixed_abs, tag = 'smem constant byte address 0x4 - core index']
  #allocation1 [shape = 'u32[144,128]{1,0:T(1,128)}', space=vmem, size = 0x12000, scoped, tag = 'internal scratch']
  %s0 = inlined_call_operand.vmem [shape: f32[8,256], index: 0, kind: input, shape index: {}]
  %s1 = inlined_call_operand.vmem [shape: f32[8,1], index: 1, kind: input, shape index: {}]
  %s2 = inlined_call_operand.vmem [shape: f32[8,256], index: 2, kind: output, shape index: {}]
  %s3 = sld [smem:[#allocation0]]
  $region18: #{_drop_channels.1} parent=0
    _
  %s5 = ssub.s32 1, %s3
  %s6 = scalar_select 0, %s5, %s3
  // Predicated region
  $region2: #{_drop_channels.1} parent=0 // pred_check
    _
  $region3: #{_drop_channels.1} parent=0 // pred_check_branch
    %8 = sbr.rel (0) target = $region5
  $region4: #{_drop_channels.1} parent=0 // pred_region
    _
  $region5: #{_drop_channels.1} parent=0 // pred_fallthru
    _
  // Predicated region
  $region6: #{_drop_channels.1} parent=0 // pred_check
    _
  $region7: #{_drop_channels.1} parent=0 // pred_check_branch
    %10 = sbr.rel (0) target = $region9
  $region8: #{_drop_channels.1} parent=0 // pred_region
    _
  $region9: #{_drop_channels.1} parent=0 // pred_fallthru
    _
  %v11 = vld [vmem:[%s0] sm:$0xff]
  %v12 = vld [vmem:[%s0 + $0x8] sm:$0xff]
  %v13 = vld [vmem:[%s1] sm:$0xff]
  %15 = vset.pattern.permute.xlu0 0
  %16 = vperm.xlu0 %15, %v13
  %v17 = vpop.permute.xlu0 %16
  %v19 = vmul.f32 %v11, %v17
  %v20 = vmul.f32 %v12, %v17
  %21 = vst [vmem:[%s2] sm:$0xff] %v19
  %22 = vst [vmem:[%s2 + $0x8] sm:$0xff] %v20
  // Predicated region
  $region10: #{_drop_channels.1} parent=0 // pred_check
    _
  $region11: #{_drop_channels.1} parent=0 // pred_check_branch
    %24 = sbr.rel (0) target = $region13
  $region12: #{_drop_channels.1} parent=0 // pred_region
    _
  $region13: #{_drop_channels.1} parent=0 // pred_fallthru
    _
  // Predicated region
  $region14: #{_drop_channels.1} parent=0 // pred_check
    _
  $region15: #{_drop_channels.1} parent=0 // pred_check_branch
    %26 = sbr.rel (0) target = $region17
  $region16: #{_drop_channels.1} parent=0 // pred_region
    _
  $region17: #{_drop_channels.1} parent=0 // pred_fallthru
    _

</llo_original>
